<compile_context>
chip_gen: v7x
topology: tpu7x:2x2x1
jax: 0.10.0
libtpu: 0.0.40
codegen_flags: <defaults>
</compile_context>

<pallas_src>
import functools

import jax
import jax.numpy as jnp
from jax.experimental import pallas as pl
from jax.experimental.pallas import tpu as pltpu


def _nt_xent_kernel(q_ref, k_ref, p_ref, out_ref, l_scr, *, max_logit):
    """One (row-tile, column-tile) step of the fixed-max logsumexp NT-Xent."""
    ki = pl.program_id(1)

    @pl.when(ki == 0)
    def _():
        l_scr[...] = jnp.zeros(l_scr.shape, dtype=jnp.float32)

    q = q_ref[...]                                   # (tq, D) bf16, rows * sqrt(1/T)
    # (tq, tk) similarity tile on the MXU (bf16 inputs, f32 accumulation).
    # 1/temperature is already folded into the operands, so no post-scale.
    sim = jax.lax.dot_general(
        q, k_ref[...],
        dimension_numbers=(((1,), (1,)), ((), ())),
        preferred_element_type=jnp.float32,
    )

    # Fixed-max accumulation over ALL columns (diag included; its contribution
    # is removed analytically at finalize time).  max_logit == 1/T is an exact
    # upper bound of every logit (cosine similarity <= 1), so this equals the
    # online/flash logsumexp recurrence without the recurrence.
    # TODO(synk): for extreme temperatures (T < ~0.02) with adversarially
    # anti-correlated inputs the shifted exps can underflow; the 1e-30 clamp at
    # finalize keeps the result finite.
    l_scr[...] += jnp.sum(jnp.exp(sim - max_logit), axis=-1, keepdims=True)

    @pl.when(ki == pl.num_programs(1) - 1)
    def _():
        qf = q.astype(jnp.float32)                   # (tq, D)
        pf = p_ref[...].astype(jnp.float32)          # partner rows zn[(i+N/2) % N]
        # Diagonal (self) logit: same bf16 operands the MXU saw for sim[i, i].
        self_sim = jnp.sum(qf * qf, axis=-1, keepdims=True)      # (tq, 1)
        # Positive logit: analytic row-wise dot with the partner rows.
        pos = jnp.sum(qf * pf, axis=-1, keepdims=True)           # (tq, 1)
        # Remove the diagonal's exp contribution -> logsumexp over j != i.
        l_neg = jnp.maximum(l_scr[...] - jnp.exp(self_sim - max_logit), 1e-30)
        out_ref[...] = max_logit + jnp.log(l_neg) - pos


def _pick_tile(n, target):
    """Largest divisor of n that is a multiple of 8 and <= target."""
    if n <= target:
        return n
    best = 0
    t = 8
    while t <= target:
        if n % t == 0:
            best = t
        t += 8
    return best if best > 0 else n  # fall back to a single (full-extent) block


def _default_tiles(n):
    vmem_bytes = 64 << 20
    try:  # trace-time HW query; harmless fallback if unavailable
        vmem_bytes = int(
            getattr(pltpu.get_tpu_info(), "vmem_capacity_bytes", vmem_bytes))
    except Exception:
        pass
    # 128 MiB parts (v5e/v6e) can afford wider column tiles than v7x (64 MiB).
    tk_target = 2048 if vmem_bytes >= (100 << 20) else 1024
    return _pick_tile(n, 256), _pick_tile(n, tk_target)


def _vmem_limit_bytes(tq, tk, d):
    inputs = 2 * 2 * d * (2 * tq + tk)      # double-buffered bf16 q, partner, k blocks
    out = 2 * 4 * tq                        # double-buffered (tq, 1) f32 output
    scratch = 4 * tq                        # running-sum accumulator
    temps = 6 * 4 * tq * tk                 # sim tile + exp temporaries (f32)
    est = inputs + out + scratch + temps + (4 << 20)   # headroom
    return int(min(max(est, 32 << 20), 56 << 20))      # stay under v7x physical VMEM


def nt_xent_loss(z_i, z_j, *, batch_size, temperature, world_size,
                 tile_q=None, tile_k=None):
    """Pallas implementation of NT_Xent.forward(z_i, z_j)."""
    half_n = batch_size * world_size
    n = 2 * half_n
    d = z_i.shape[-1]
    assert z_i.shape == (half_n, d) and z_j.shape == (half_n, d)

    z = jnp.concatenate([z_i, z_j], axis=0).astype(jnp.float32)   # (N, D)

    # Normalize ONCE in the wrapper (not per tile).
    # TODO(synk): PyTorch F.cosine_similarity clamps ||a||*||b|| at eps=1e-8;
    # here each norm is clamped at 1e-8 (differs only for near-zero vectors).
    sq_norm = jnp.sum(z * z, axis=-1, keepdims=True)
    inv_norm = jax.lax.rsqrt(jnp.maximum(sq_norm, 1e-16))
    # Fold 1/temperature into BOTH matmul operands via sqrt(1/T), then cast to
    # bf16 for native-rate MXU matmul (softmax math stays in f32 in-kernel).
    inv_temp = float(1.0 / float(temperature))
    scale = inv_temp ** 0.5
    zn = (z * inv_norm * scale).astype(jnp.bfloat16)               # (N, D)
    # Partner rows: zn_pos[i] = zn[(i + N/2) % N]  (positive pair of row i).
    zn_pos = jnp.roll(zn, -half_n, axis=0)

    if tile_q is None or tile_k is None:
        dq, dk = _default_tiles(n)
        tile_q = dq if tile_q is None else tile_q
        tile_k = dk if tile_k is None else tile_k
    tq, tk = int(tile_q), int(tile_k)
    assert n % tq == 0 and n % tk == 0, (n, tq, tk)

    grid = (n // tq, n // tk)

    kernel = functools.partial(_nt_xent_kernel, max_logit=inv_temp)

    per_row = pl.pallas_call(
        kernel,
        out_shape=jax.ShapeDtypeStruct((n, 1), jnp.float32),
        grid_spec=pltpu.PrefetchScalarGridSpec(
            num_scalar_prefetch=0,
            grid=grid,
            in_specs=[
                pl.BlockSpec((tq, d), lambda qi, ki: (qi, 0)),  # resident row block
                pl.BlockSpec((tk, d), lambda qi, ki: (ki, 0)),  # streamed column block
                pl.BlockSpec((tq, d), lambda qi, ki: (qi, 0)),  # partner rows (positives)
            ],
            out_specs=pl.BlockSpec((tq, 1), lambda qi, ki: (qi, 0)),
            scratch_shapes=[
                pltpu.VMEM((tq, 1), jnp.float32),   # running sum (fixed-max LSE)
            ],
        ),
        compiler_params=pltpu.CompilerParams(
            dimension_semantics=("parallel", "arbitrary"),
            vmem_limit_bytes=_vmem_limit_bytes(tq, tk, d),
        ),
    )(zn, zn, zn_pos)

    return jnp.sum(per_row) / jnp.float32(n)


def _nt_xent_reference(z_i, z_j, *, batch_size, temperature, world_size):
    """Pure-JAX f32 reference mirroring the PyTorch module."""
    half_n = batch_size * world_size
    z = jnp.concatenate([z_i, z_j], axis=0).astype(jnp.float32)
    n = z.shape[0]
    norm = jnp.maximum(jnp.linalg.norm(z, axis=-1, keepdims=True), 1e-8)
    zn = z / norm
    sim = (zn @ zn.T) / temperature
    rows = jnp.arange(n)
    pos = sim[rows, (rows + half_n) % n]
    sim_nodiag = jnp.where(jnp.eye(n, dtype=bool), -jnp.inf, sim)
    lse = jax.scipy.special.logsumexp(sim_nodiag, axis=-1)
    return jnp.sum(lse - pos) / n


if __name__ == "__main__":
    # --- Small smoke test (toy shapes consistent with the module) ---
    batch_size, world_size, temperature, hidden = 4, 1, 0.5, 32
    k_i, k_j = jax.random.split(jax.random.PRNGKey(0))
    z_i = jax.random.normal(k_i, (batch_size * world_size, hidden), jnp.float32)
    z_j = jax.random.normal(k_j, (batch_size * world_size, hidden), jnp.float32)

    loss = nt_xent_loss(
        z_i, z_j,
        batch_size=batch_size, temperature=temperature, world_size=world_size)
    loss = jax.block_until_ready(loss)
    ref = _nt_xent_reference(
        z_i, z_j,
        batch_size=batch_size, temperature=temperature, world_size=world_size)
    # bf16 MXU matmul -> loosened tolerance (softmax math is still f32).
    assert jnp.allclose(loss, ref, rtol=3e-2, atol=3e-2), (loss, ref)

    # --- Tiled test: exercises the (qi, ki) grid, the fixed-max accumulation
    #     and the cross-tile positive-pair roll (grid = (4, 4)). ---
    bs2, ws2, temp2, hid2 = 256, 1, 0.1, 128
    k_i2, k_j2 = jax.random.split(jax.random.PRNGKey(1))
    z_i2 = jax.random.normal(k_i2, (bs2 * ws2, hid2), jnp.float32)
    z_j2 = jax.random.normal(k_j2, (bs2 * ws2, hid2), jnp.float32)

    loss2 = nt_xent_loss(
        z_i2, z_j2, batch_size=bs2, temperature=temp2, world_size=ws2,
        tile_q=128, tile_k=128)
    loss2 = jax.block_until_ready(loss2)
    ref2 = _nt_xent_reference(
        z_i2, z_j2, batch_size=bs2, temperature=temp2, world_size=ws2)
    assert jnp.allclose(loss2, ref2, rtol=3e-2, atol=3e-2), (loss2, ref2)

    print("KERNEL_OK")
</pallas_src>

<mosaic_0001>
module attributes {stable_mosaic.version = 11 : i64} {
  func.func @_nt_xent_kernel(%arg0: i32, %arg1: i32, %arg2: memref<8x32xbf16, #tpu.memory_space<vmem>>, %arg3: memref<8x32xbf16, #tpu.memory_space<vmem>>, %arg4: memref<8x32xbf16, #tpu.memory_space<vmem>>, %arg5: memref<8x1xf32, #tpu.memory_space<vmem>>, %arg6: memref<8x1xf32, #tpu.memory_space<vmem>>) attributes {dimension_semantics = [#tpu.dimension_semantics<parallel>, #tpu.dimension_semantics<arbitrary>], iteration_bounds = array<i64: 1, 1>, scalar_prefetch = 0 : i64, scratch_operands = 1 : i64, tpu.core_type = #tpu.core_type<tc>, window_params = [{transform_indices = @transform_0, window_bounds = array<i64: 8, 32>}, {transform_indices = @transform_1, window_bounds = array<i64: 8, 32>}, {transform_indices = @transform_2, window_bounds = array<i64: 8, 32>}, {transform_indices = @transform_3, window_bounds = array<i64: 8, 1>}]} {
    %c0_i32 = arith.constant 0 : i32
    %0 = arith.cmpi eq, %arg1, %c0_i32 : i32
    %1 = arith.extui %0 : i1 to i32
    %c0_i32_0 = arith.constant 0 : i32
    %2 = arith.cmpi ne, %1, %c0_i32_0 : i32
    scf.if %2 {
      %cst_12 = arith.constant 0.000000e+00 : f32
      %17 = vector.broadcast %cst_12 : f32 to vector<8x1xf32>
      %c0_13 = arith.constant 0 : index
      %c0_14 = arith.constant 0 : index
      %18 = vector.load %arg6[%c0_13, %c0_14] : memref<8x1xf32, #tpu.memory_space<vmem>>, vector<8x1xf32>
      tpu.vector_store %arg6[%c0_13, %c0_14], %17 {strides = array<i32>} : memref<8x1xf32, #tpu.memory_space<vmem>>, vector<8x1xf32>,
    } else {
    }
    %c0 = arith.constant 0 : index
    %c0_1 = arith.constant 0 : index
    %3 = vector.load %arg2[%c0, %c0_1] : memref<8x32xbf16, #tpu.memory_space<vmem>>, vector<8x32xbf16>
    %c0_2 = arith.constant 0 : index
    %c0_3 = arith.constant 0 : index
    %4 = vector.load %arg3[%c0_2, %c0_3] : memref<8x32xbf16, #tpu.memory_space<vmem>>, vector<8x32xbf16>
    %cst = arith.constant dense<0.000000e+00> : vector<8x8xf32>
    %5 = tpu.matmul %3, %4, %cst {dimension_numbers = #tpu.dot_dimension_numbers<[1], [1], [0], [0], [0, 0, 1, 0], [], []>} : vector<8x32xbf16>, vector<8x32xbf16>, vector<8x8xf32> -> vector<8x8xf32>
    %c0_4 = arith.constant 0 : index
    %c0_5 = arith.constant 0 : index
    %6 = vector.load %arg6[%c0_4, %c0_5] : memref<8x1xf32, #tpu.memory_space<vmem>>, vector<8x1xf32>
    %cst_6 = arith.constant 2.000000e+00 : f32
    %7 = vector.broadcast %cst_6 : f32 to vector<8x8xf32>
    %8 = arith.subf %5, %7 : vector<8x8xf32>
    %9 = math.exp %8 : vector<8x8xf32>
    %cst_7 = arith.constant dense<0.000000e+00> : vector<8xf32>
    %10 = vector.multi_reduction <add>, %9, %cst_7 [1] : vector<8x8xf32> to vector<8xf32>
    %11 = vector.shape_cast %10 : vector<8xf32> to vector<8x1xf32>
    %12 = arith.addf %6, %11 : vector<8x1xf32>
    %c0_8 = arith.constant 0 : index
    %c0_9 = arith.constant 0 : index
    %13 = vector.load %arg6[%c0_8, %c0_9] : memref<8x1xf32, #tpu.memory_space<vmem>>, vector<8x1xf32>
    tpu.vector_store %arg6[%c0_8, %c0_9], %12 {strides = array<i32>} : memref<8x1xf32, #tpu.memory_space<vmem>>, vector<8x1xf32>,
    %c0_i32_10 = arith.constant 0 : i32
    %14 = arith.cmpi eq, %arg1, %c0_i32_10 : i32
    %15 = arith.extui %14 : i1 to i32
    %c0_i32_11 = arith.constant 0 : i32
    %16 = arith.cmpi ne, %15, %c0_i32_11 : i32
    scf.if %16 {
      %17 = arith.extf %3 : vector<8x32xbf16> to vector<8x32xf32>
      %c0_12 = arith.constant 0 : index
      %c0_13 = arith.constant 0 : index
      %18 = vector.load %arg4[%c0_12, %c0_13] : memref<8x32xbf16, #tpu.memory_space<vmem>>, vector<8x32xbf16>
      %19 = arith.extf %18 : vector<8x32xbf16> to vector<8x32xf32>
      %20 = arith.mulf %17, %17 : vector<8x32xf32>
      %cst_14 = arith.constant dense<0.000000e+00> : vector<8xf32>
      %21 = vector.multi_reduction <add>, %20, %cst_14 [1] : vector<8x32xf32> to vector<8xf32>
      %22 = vector.shape_cast %21 : vector<8xf32> to vector<8x1xf32>
      %23 = arith.mulf %17, %19 : vector<8x32xf32>
      %cst_15 = arith.constant dense<0.000000e+00> : vector<8xf32>
      %24 = vector.multi_reduction <add>, %23, %cst_15 [1] : vector<8x32xf32> to vector<8xf32>
      %25 = vector.shape_cast %24 : vector<8xf32> to vector<8x1xf32>
      %c0_16 = arith.constant 0 : index
      %c0_17 = arith.constant 0 : index
      %26 = vector.load %arg6[%c0_16, %c0_17] : memref<8x1xf32, #tpu.memory_space<vmem>>, vector<8x1xf32>
      %cst_18 = arith.constant 2.000000e+00 : f32
      %27 = vector.broadcast %cst_18 : f32 to vector<8x1xf32>
      %28 = arith.subf %22, %27 : vector<8x1xf32>
      %29 = math.exp %28 : vector<8x1xf32>
      %30 = arith.subf %26, %29 : vector<8x1xf32>
      %cst_19 = arith.constant 1.000000e-30 : f32
      %31 = vector.broadcast %cst_19 : f32 to vector<8x1xf32>
      %32 = arith.maximumf %30, %31 : vector<8x1xf32>
      %33 = math.log %32 : vector<8x1xf32>
      %cst_20 = arith.constant 2.000000e+00 : f32
      %34 = vector.broadcast %cst_20 : f32 to vector<8x1xf32>
      %35 = arith.addf %34, %33 : vector<8x1xf32>
      %36 = arith.subf %35, %25 : vector<8x1xf32>
      %c0_21 = arith.constant 0 : index
      %c0_22 = arith.constant 0 : index
      %37 = vector.load %arg5[%c0_21, %c0_22] : memref<8x1xf32, #tpu.memory_space<vmem>>, vector<8x1xf32>
      tpu.vector_store %arg5[%c0_21, %c0_22], %36 {strides = array<i32>} : memref<8x1xf32, #tpu.memory_space<vmem>>, vector<8x1xf32>,
    } else {
    }
    return
  }
  func.func @transform_0(%arg0: i32, %arg1: i32) -> (i32, i32) {
    %c0_i32 = arith.constant 0 : i32
    %c0_i32_0 = arith.constant 0 : i32
    return %arg0, %c0_i32 : i32, i32
  }
  func.func @transform_1(%arg0: i32, %arg1: i32) -> (i32, i32) {
    %c0_i32 = arith.constant 0 : i32
    %c0_i32_0 = arith.constant 0 : i32
    return %arg1, %c0_i32 : i32, i32
  }
  func.func @transform_2(%arg0: i32, %arg1: i32) -> (i32, i32) {
    %c0_i32 = arith.constant 0 : i32
    %c0_i32_0 = arith.constant 0 : i32
    return %arg0, %c0_i32 : i32, i32
  }
  func.func @transform_3(%arg0: i32, %arg1: i32) -> (i32, i32) {
    %c0_i32 = arith.constant 0 : i32
    %c0_i32_0 = arith.constant 0 : i32
    return %arg0, %c0_i32 : i32, i32
  }
}

</mosaic_0001>

<llo_original>
// kernel: tpu_custom_call.1
$region0: #{tpu_custom_call.1}
  #allocation0 [shape = 'u32[]', space=smem, size = 0x4, offset = 0x4, fixed_abs, tag = 'smem constant byte address 0x4 - core index']
  #allocation1 [shape = 'u32[144,128]{1,0:T(1,128)}', space=vmem, size = 0x12000, scoped, tag = 'internal scratch']
  #allocation2 [shape = 'f32[8,1]{1,0:T(8,128)}', space=vmem, size = 0x1000, scoped, tag = 'scratch operand']
  %s0 = inlined_call_operand.hbm [shape: bf16[8,32], index: 0, kind: input, shape index: {}]
  %s1 = inlined_call_operand.hbm [shape: bf16[8,32], index: 1, kind: input, shape index: {}]
  %s2 = inlined_call_operand.vmem [shape: bf16[8,32], index: 2, kind: input, shape index: {}]
  %s3 = inlined_call_operand.vmem [shape: f32[8,1], index: 3, kind: output, shape index: {}]
  %s4 = sld [smem:[#allocation0]]
  $region38: #{tpu_custom_call.1} parent=0
    _
  %s6 = ssub.s32 1, %s4
  %s7 = scalar_select 0, %s6, %s4
  $region1: #{tpu_custom_call.1} parent=0
    #allocation3 [shape = 'u8[2048]{0}', space=vmem, size = 0x800, scoped, tag = 'input window, operand 0, single buffered']
    #allocation4 [shape = 's32[1]{0}', space=sflag, size = 0x4, scoped, tag = 'scoped memory for tpu_custom_call.1']
    #allocation5 [shape = 'u8[2048]{0}', space=vmem, size = 0x800, scoped, tag = 'input window, operand 1, single buffered']
    #allocation6 [shape = 's32[1]{0}', space=sflag, size = 0x4, scoped, tag = 'scoped memory for tpu_custom_call.1']
    %8 = vsyncpa [#allocation4], 0
    %9 = vsyncpa [#allocation6], 0
    // Predicated region
    $region2: #{tpu_custom_call.1} parent=1 // pred_check
      _
    $region3: #{tpu_custom_call.1} parent=1 // pred_check_branch
      %11 = sbr.rel (0) target = $region5
    $region4: #{tpu_custom_call.1} parent=1 // pred_region
      %s13 = ssub.s32 64, 64
      %14 = vsyncadd [#allocation4], %s13
      %s16 = sshll.u32 [#allocation3], 4
      %s17 = int_to_ptr.vmem [resolvable:$true] %s16
      %19 = dma.hbm_to_vmem [thread:$0]  %s0, 64, %s17, [#allocation4]
    $region5: #{tpu_custom_call.1} parent=1 // pred_fallthru
      _
    // Predicated region
    $region6: #{tpu_custom_call.1} parent=1 // pred_check
      _
    $region7: #{tpu_custom_call.1} parent=1 // pred_check_branch
      %21 = sbr.rel (0) target = $region9
    $region8: #{tpu_custom_call.1} parent=1 // pred_region
      %s23 = ssub.s32 64, 64
      %24 = vsyncadd [#allocation6], %s23
      %s26 = sshll.u32 [#allocation5], 4
      %s27 = int_to_ptr.vmem [resolvable:$true] %s26
      %29 = dma.hbm_to_vmem [thread:$0]  %s1, 64, %s27, [#allocation6]
    $region9: #{tpu_custom_call.1} parent=1 // pred_fallthru
      _
    // Predicated region
    $region10: #{tpu_custom_call.1} parent=1 // pred_check
      _
    $region11: #{tpu_custom_call.1} parent=1 // pred_check_branch
      %31 = sbr.rel (0) target = $region13
    $region12: #{tpu_custom_call.1} parent=1 // pred_region
      _
    $region13: #{tpu_custom_call.1} parent=1 // pred_fallthru
      _
    // Predicated region
    $region14: #{tpu_custom_call.1} parent=1 // pred_check
      _
    $region15: #{tpu_custom_call.1} parent=1 // pred_check_branch
      %33 = sbr.rel (0) target = $region17
    $region16: #{tpu_custom_call.1} parent=1 // pred_region
      %34 = dma.done [#allocation4], 64
    $region17: #{tpu_custom_call.1} parent=1 // pred_fallthru
      _
    // Predicated region
    $region18: #{tpu_custom_call.1} parent=1 // pred_check
      _
    $region19: #{tpu_custom_call.1} parent=1 // pred_check_branch
      %36 = sbr.rel (0) target = $region21
    $region20: #{tpu_custom_call.1} parent=1 // pred_region
      %37 = dma.done [#allocation6], 64
    $region21: #{tpu_custom_call.1} parent=1 // pred_fallthru
      _
    %p39 = scmp.eq.s32.totalorder 0, 0
    // Predicated region
    $region22: #{tpu_custom_call.1} parent=1 // pred_check
      %p40 = pneg %p39
    $region23: #{tpu_custom_call.1} parent=1 // pred_check_branch
      %42 = sbr.rel (%p40) target = $region25
    $region24: #{tpu_custom_call.1} parent=1 // pred_region
      %vm43 = vcmask 7168
      %44 = vst.msk [vmem:[#allocation2] sm:$0xff] %vm43, 0.0
    $region25: #{tpu_custom_call.1} parent=1 // pred_fallthru
      _
    %v45 = vld [vmem:[#allocation3] sm:$0xf]
    %v46 = vld [vmem:[#allocation5] sm:$0xf]
    %vm47 = vcmask 261120
    %v49 = vsel %vm47, %v45, 0
    %v52 = vsel %vm47, %v46, 0
    %54 = vmatprep.subr.bf16.mxu0 0
    %55 = vmatpush1.bf16.xpose.msra.mxu0 %v52
    %56 = vmatprep.subr.bf16.mxu0 0
    %57 = vmatpush1.bf16.xpose.msra.mxu0 0
    %58 = vmatprep.subr.bf16.mxu0 0
    %59 = vmatpush1.bf16.xpose.msra.mxu0 0
    %60 = vmatprep.subr.bf16.mxu0 0
    %61 = vmatpush1.bf16.xpose.msra.mxu0 0
    %62 = vmatprep.subr.bf16.mxu0 0
    %63 = vmatpush1.bf16.xpose.msra.mxu0 0
    %64 = vmatprep.subr.bf16.mxu0 0
    %65 = vmatpush1.bf16.xpose.msra.mxu0 0
    %66 = vmatprep.subr.bf16.mxu0 0
    %67 = vmatpush1.bf16.xpose.msra.mxu0 0
    %68 = vmatprep.subr.bf16.mxu0 0
    %69 = vmatpush1.bf16.xpose.msra.mxu0 0
    %70 = vmatprep.subr.bf16.mxu0 0
    %71 = vmatpush1.bf16.xpose.msra.mxu0 0
    %72 = vmatprep.subr.bf16.mxu0 0
    %73 = vmatpush1.bf16.xpose.msra.mxu0 0
    %74 = vmatprep.subr.bf16.mxu0 0
    %75 = vmatpush1.bf16.xpose.msra.mxu0 0
    %76 = vmatprep.subr.bf16.mxu0 0
    %77 = vmatpush1.bf16.xpose.msra.mxu0 0
    %78 = vmatprep.subr.bf16.mxu0 0
    %79 = vmatpush1.bf16.xpose.msra.mxu0 0
    %80 = vmatprep.subr.bf16.mxu0 0
    %81 = vmatpush1.bf16.xpose.msra.mxu0 0
    %82 = vmatprep.subr.bf16.mxu0 0
    %83 = vmatpush1.bf16.xpose.msra.mxu0 0
    %84 = vmatprep.subr.bf16.mxu0 0
    %85 = vmatpush1.bf16.xpose.msra.mxu0 0
    %86 = vmatprep.mubr.bf16.mxu0 0
    %87 = vmatmul.mubr.bf16.gmra.mrb[0].mxu0 %v49
    %v88 = vpop.f32.mrb[0].mxu0
    %v89 = vadd.f32 0.0, %v88
    %v90 = vpop.f32.mrb[0].mxu0
    %v91 = vpop.f32.mrb[0].mxu0
    %v92 = vpop.f32.mrb[0].mxu0
    %93 = vdwg.mxu0
    %v94 = vld [vmem:[#allocation2] sm:$0xff]
    %v95 = vsub.f32 %v89, 2.0
    %v96 = vmul.f32 %v95, 1.442695
    %v97 = vpow.pop %v96
    %vm98 = vcmask 64512
    %v99 = vsel %vm98, %v97, 0.0
    %100 = vadd.xlane.f32.xlu0 %v99
    %v101 = vpop.xlane.xlu0 %100
    %v102 = vadd.f32 %v94, %v101
    %vm103 = vcmask 7168
    %104 = vst.msk [vmem:[#allocation2] sm:$0xff] %vm103, %v102
    // Predicated region
    $region26: #{tpu_custom_call.1} parent=1 // pred_check
      %p105 = pneg %p39
    $region27: #{tpu_custom_call.1} parent=1 // pred_check_branch
      %107 = sbr.rel (%p105) target = $region29
    $region28: #{tpu_custom_call.1} parent=1 // pred_region
      %v108 = vunpack.c.l.bf16 %v45
      %v109 = vld [vmem:[%s2] sm:$0xf]
      %v110 = vunpack.c.l.bf16 %v109
      %v111 = vmul.f32 %v108, %v108
      %v112 = vsel %vm47, %v111, 0.0
      %113 = vadd.xlane.f32.xlu0 %v112
      %v114 = vpop.xlane.xlu0 %113
      %v115 = vmul.f32 %v108, %v110
      %v116 = vsel %vm47, %v115, 0.0
      %117 = vadd.xlane.f32.xlu0 %v116
      %v118 = vpop.xlane.xlu0 %117
      %v119 = vld [vmem:[#allocation2] sm:$0xff]
      %v120 = vsub.f32 %v114, 2.0
      %v121 = vmul.f32 %v120, 1.442695
      %v122 = vpow.pop %v121
      %v123 = vsub.f32 %v119, %v122
      %v124 = vmax.f32 %v123, 1e-30
      %v125 = vlog2.pop %v124
      %v126 = vmul.f32 %v125, 0.6931472
      %v127 = vadd.f32 %v126, 2.0
      %v128 = vsub.f32 %v127, %v118
      %129 = vst.msk [vmem:[%s3] sm:$0xff] %vm103, %v128
    $region29: #{tpu_custom_call.1} parent=1 // pred_fallthru
      _
    // Predicated region
    $region30: #{tpu_custom_call.1} parent=1 // pred_check
      _
    $region31: #{tpu_custom_call.1} parent=1 // pred_check_branch
      %131 = sbr.rel (0) target = $region33
    $region32: #{tpu_custom_call.1} parent=1 // pred_region
      _
    $region33: #{tpu_custom_call.1} parent=1 // pred_fallthru
      _
    // Predicated region
    $region34: #{tpu_custom_call.1} parent=1 // pred_check
      _
    $region35: #{tpu_custom_call.1} parent=1 // pred_check_branch
      %133 = sbr.rel (0) target = $region37
    $region36: #{tpu_custom_call.1} parent=1 // pred_region
      _
    $region37: #{tpu_custom_call.1} parent=1 // pred_fallthru
      _
    %134 = vsyncpa [#allocation4], 1
    %135 = vsyncpa [#allocation6], 1

</llo_original>
